<compile_context>
chip_gen: v6e
topology: v6e:2x2x1
jax: 0.10.0
libtpu: 0.0.40
codegen_flags: <defaults>
</compile_context>

<pallas_src>
import jax
import jax.numpy as jnp
from jax import lax
from jax.experimental import pallas as pl
from jax.experimental.pallas import tpu as pltpu

HIDDEN_SIZE = 8
NUM_OF_LINKS = 4                     # stand-in for wandb.config.NUM_OF_LINKS
N_ACTIONS = NUM_OF_LINKS
N_STATES = NUM_OF_LINKS * 2
IN_DIM = N_STATES + N_ACTIONS        # 12
WI = 2.0 / HIDDEN_SIZE               # std used for the weight init (reference)

# Column layout of the packed parameter slab (shape [HIDDEN_SIZE, SLAB_COLS]).
C_W1 = 0                             # [:, 0:12]  = layer1.weight   [8, 12]
C_W2 = C_W1 + IN_DIM                 # [:, 12:20] = layer2.weight   [8, 8]
C_W3 = C_W2 + HIDDEN_SIZE            # [:, 20]    = value.weight.T  [8]
C_B1 = C_W3 + 1                      # [:, 21]    = layer1.bias     [8]
C_B2 = C_B1 + 1                      # [:, 22]    = layer2.bias     [8]
C_B3 = C_B2 + 1                      # [0, 23]    = value.bias      scalar
SLAB_COLS = C_B3 + 1                 # 24


def _round_up(n, m):
    return (n + m - 1) // m * m


def critic_kernel(x_ref, p_ref, o_ref):
    """One batch tile of the full MLP, batch kept on the lane axis."""
    x = x_ref[...]                                  # [TB, IN_DIM] f32

    # Static slices of the resident parameter slab (tiny, VMEM-resident).
    w1 = p_ref[:, C_W1:C_W1 + IN_DIM]               # [H, IN_DIM]  (PyTorch layout)
    w2 = p_ref[:, C_W2:C_W2 + HIDDEN_SIZE]          # [H, H]
    w3c = p_ref[:, C_W3:C_W3 + 1]                   # [H, 1]
    b1c = p_ref[:, C_B1:C_B1 + 1]                   # [H, 1]
    b2c = p_ref[:, C_B2:C_B2 + 1]                   # [H, 1]
    b3 = p_ref[0:1, C_B3:C_B3 + 1]                  # [1, 1]

    # h1ᵀ = W1 · xᵀ : contract the feature dim of both operands -> [H, TB]
    # (same "contract-on-last-dims" pattern as q·kᵀ in attention).
    h1t = lax.dot_general(w1, x, (((1,), (1,)), ((), ())),
                          preferred_element_type=jnp.float32)
    h1t = jnp.maximum(h1t + b1c, 0.0)               # [H, TB]

    # h2ᵀ = W2 · h1ᵀ  -> [H, TB]   (MXU, N = TB is lane-dense)
    h2t = jnp.dot(w2, h1t, preferred_element_type=jnp.float32)
    h2t = jnp.maximum(h2t + b2c, 0.0)               # [H, TB]

    # Final 8 -> 1 layer on the VPU/XLU: broadcast-multiply + sublane reduce.
    v = jnp.sum(w3c * h2t, axis=0, keepdims=True) + b3   # [1, TB] lane-dense

    o_ref[0] = v.astype(o_ref.dtype)                # o_ref block is [1, 1, TB]


def pack_params(params):
    """Pack all weights/biases (PyTorch [out, in] layout) into one slab."""
    w1, b1, w2, b2, w3, b3 = params
    slab = jnp.zeros((HIDDEN_SIZE, SLAB_COLS), jnp.float32)
    slab = slab.at[:, C_W1:C_W1 + IN_DIM].set(w1)
    slab = slab.at[:, C_W2:C_W2 + HIDDEN_SIZE].set(w2)
    slab = slab.at[:, C_W3].set(w3[0])
    slab = slab.at[:, C_B1].set(b1)
    slab = slab.at[:, C_B2].set(b2)
    slab = slab.at[0, C_B3].set(b3[0])
    return slab


def critic_forward(x, params, *, tb=512):
    """x: [B, IN_DIM] f32 -> [B, 1] f32 (same semantics as Critic.forward)."""
    B = x.shape[0]
    slab = pack_params(params)

    # Batch tile: up to `tb` rows (24 KiB of x per tile), padded to a multiple
    # of 8 so the (8, 128) block rule always holds.
    TB = min(tb, _round_up(B, 8))
    B_pad = _round_up(B, TB)
    G = B_pad // TB
    if B_pad != B:
        x = jnp.pad(x, ((0, B_pad - B), (0, 0)))

    out = pl.pallas_call(
        critic_kernel,
        out_shape=jax.ShapeDtypeStruct((G, 1, TB), jnp.float32),
        grid=(G,),
        in_specs=[
            # Streaming batch tiles of x (double-buffered by Pallas).
            pl.BlockSpec((TB, IN_DIM), lambda i: (i, 0)),
            # Single packed parameter slab, DMA'd once and kept resident.
            pl.BlockSpec((HIDDEN_SIZE, SLAB_COLS), lambda i: (0, 0)),
        ],
        # Lane-dense output: one [1, TB] row per batch tile.
        out_specs=pl.BlockSpec((1, 1, TB), lambda i: (i, 0, 0)),
        compiler_params=pltpu.CompilerParams(
            dimension_semantics=("parallel",)),
    )(x, slab)

    # (G, 1, TB) -> (B, 1): row-major flatten preserves batch order; the
    # reshape/slice is free layout plumbing in the wrapper.
    return out.reshape(B_pad, 1)[:B]


def init_params(key):
    """Weights ~ N(0, WI) as in the reference; biases use nn.Linear's default
    uniform(-1/sqrt(fan_in), 1/sqrt(fan_in)). Weights are kept in PyTorch's
    [out, in] layout (which is exactly what the transposed kernel wants)."""
    k1, k2, k3, kb1, kb2, kb3 = jax.random.split(key, 6)
    w1 = jax.random.normal(k1, (HIDDEN_SIZE, IN_DIM), jnp.float32) * WI
    w2 = jax.random.normal(k2, (HIDDEN_SIZE, HIDDEN_SIZE), jnp.float32) * WI
    w3 = jax.random.normal(k3, (1, HIDDEN_SIZE), jnp.float32) * WI
    b1 = jax.random.uniform(kb1, (HIDDEN_SIZE,), jnp.float32, -1.0, 1.0) * (
        float(IN_DIM) ** -0.5)
    b2 = jax.random.uniform(kb2, (HIDDEN_SIZE,), jnp.float32, -1.0, 1.0) * (
        float(HIDDEN_SIZE) ** -0.5)
    b3 = jax.random.uniform(kb3, (1,), jnp.float32, -1.0, 1.0) * (
        float(HIDDEN_SIZE) ** -0.5)
    return w1, b1, w2, b2, w3, b3


def critic_ref(x, params):
    """Pure-JAX reference (high precision) for correctness checking."""
    w1, b1, w2, b2, w3, b3 = params
    hi = lax.Precision.HIGHEST
    h1 = jnp.maximum(jnp.dot(x, w1.T, precision=hi) + b1, 0.0)
    h2 = jnp.maximum(jnp.dot(h1, w2.T, precision=hi) + b2, 0.0)
    return jnp.dot(h2, w3.T, precision=hi) + b3


if __name__ == "__main__":
    key = jax.random.PRNGKey(0)
    kx, kp = jax.random.split(key)

    # Large-ish batch so the grid/pipelining is exercised (2 tiles of 512,
    # with padding of the last tile); still only ~48 KiB of input data.
    B = 1000
    x = jax.random.normal(kx, (B, IN_DIM), jnp.float32)
    params = init_params(kp)

    out = jax.block_until_ready(critic_forward(x, params))
    ref = critic_ref(x, params)

    assert out.shape == (B, 1), out.shape
    max_err = jnp.max(jnp.abs(out - ref))
    assert jnp.allclose(out, ref, atol=1e-4, rtol=1e-4), (
        f"max abs err {max_err}")

    print("KERNEL_OK")
</pallas_src>

<mosaic_0001>
module attributes {stable_mosaic.version = 11 : i64} {
  func.func @critic_kernel(%arg0: i32, %arg1: memref<512x12xf32, #tpu.memory_space<vmem>>, %arg2: memref<8x24xf32, #tpu.memory_space<vmem>>, %arg3: memref<1x1x512xf32, #tpu.memory_space<vmem>>) attributes {dimension_semantics = [#tpu.dimension_semantics<parallel>], iteration_bounds = array<i64: 2>, scalar_prefetch = 0 : i64, scratch_operands = 0 : i64, tpu.core_type = #tpu.core_type<tc>, window_params = [{transform_indices = @transform_0, window_bounds = array<i64: 512, 12>}, {pipeline_mode = #tpu.pipeline_mode<synchronous>, transform_indices = @transform_1, window_bounds = array<i64: 8, 24>}, {transform_indices = @transform_2, window_bounds = array<i64: 1, 1, 512>}]} {
    %c0 = arith.constant 0 : index
    %c0_0 = arith.constant 0 : index
    %0 = vector.load %arg1[%c0, %c0_0] : memref<512x12xf32, #tpu.memory_space<vmem>>, vector<512x12xf32>
    %c0_1 = arith.constant 0 : index
    %c0_2 = arith.constant 0 : index
    %1 = vector.load %arg2[%c0_1, %c0_2] : memref<8x24xf32, #tpu.memory_space<vmem>>, vector<8x12xf32>
    %c0_3 = arith.constant 0 : index
    %c12 = arith.constant 12 : index
    %2 = vector.load %arg2[%c0_3, %c12] : memref<8x24xf32, #tpu.memory_space<vmem>>, vector<8x8xf32>
    %c0_4 = arith.constant 0 : index
    %c20 = arith.constant 20 : index
    %3 = vector.load %arg2[%c0_4, %c20] : memref<8x24xf32, #tpu.memory_space<vmem>>, vector<8x1xf32>
    %c0_5 = arith.constant 0 : index
    %c21 = arith.constant 21 : index
    %4 = vector.load %arg2[%c0_5, %c21] : memref<8x24xf32, #tpu.memory_space<vmem>>, vector<8x1xf32>
    %c0_6 = arith.constant 0 : index
    %c22 = arith.constant 22 : index
    %5 = vector.load %arg2[%c0_6, %c22] : memref<8x24xf32, #tpu.memory_space<vmem>>, vector<8x1xf32>
    %c0_7 = arith.constant 0 : index
    %c23 = arith.constant 23 : index
    %6 = vector.load %arg2[%c0_7, %c23] : memref<8x24xf32, #tpu.memory_space<vmem>>, vector<1x1xf32>
    %cst = arith.constant dense<0.000000e+00> : vector<8x512xf32>
    %7 = tpu.matmul %1, %0, %cst {dimension_numbers = #tpu.dot_dimension_numbers<[1], [1], [0], [0], [0, 0, 1, 0], [], []>} : vector<8x12xf32>, vector<512x12xf32>, vector<8x512xf32> -> vector<8x512xf32>
    %8 = vector.broadcast %4 : vector<8x1xf32> to vector<8x512xf32>
    %9 = arith.addf %7, %8 : vector<8x512xf32>
    %cst_8 = arith.constant 0.000000e+00 : f32
    %10 = vector.broadcast %cst_8 : f32 to vector<8x512xf32>
    %11 = arith.maximumf %9, %10 : vector<8x512xf32>
    %cst_9 = arith.constant dense<0.000000e+00> : vector<8x512xf32>
    %12 = tpu.matmul %2, %11, %cst_9 {dimension_numbers = #tpu.dot_dimension_numbers<[1], [0], [0], [1], [0, 0, 1, 1], [], []>} : vector<8x8xf32>, vector<8x512xf32>, vector<8x512xf32> -> vector<8x512xf32>
    %13 = vector.broadcast %5 : vector<8x1xf32> to vector<8x512xf32>
    %14 = arith.addf %12, %13 : vector<8x512xf32>
    %cst_10 = arith.constant 0.000000e+00 : f32
    %15 = vector.broadcast %cst_10 : f32 to vector<8x512xf32>
    %16 = arith.maximumf %14, %15 : vector<8x512xf32>
    %17 = vector.broadcast %3 : vector<8x1xf32> to vector<8x512xf32>
    %18 = arith.mulf %17, %16 : vector<8x512xf32>
    %cst_11 = arith.constant dense<0.000000e+00> : vector<512xf32>
    %19 = vector.multi_reduction <add>, %18, %cst_11 [0] : vector<8x512xf32> to vector<512xf32>
    %20 = vector.shape_cast %19 : vector<512xf32> to vector<1x512xf32>
    %21 = vector.broadcast %6 : vector<1x1xf32> to vector<1x512xf32>
    %22 = arith.addf %20, %21 : vector<1x512xf32>
    %c0_12 = arith.constant 0 : index
    %c0_13 = arith.constant 0 : index
    %c0_14 = arith.constant 0 : index
    %23 = vector.load %arg3[%c0_12, %c0_13, %c0_14] : memref<1x1x512xf32, #tpu.memory_space<vmem>>, vector<1x1x512xf32>
    %24 = vector.shape_cast %23 : vector<1x1x512xf32> to vector<1x512xf32>
    %25 = vector.shape_cast %22 : vector<1x512xf32> to vector<1x1x512xf32>
    tpu.vector_store %arg3[%c0_12, %c0_13, %c0_14], %25 {strides = array<i32>} : memref<1x1x512xf32, #tpu.memory_space<vmem>>, vector<1x1x512xf32>,
    return
  }
  func.func @transform_0(%arg0: i32) -> (i32, i32) {
    %c0_i32 = arith.constant 0 : i32
    %c0_i32_0 = arith.constant 0 : i32
    return %arg0, %c0_i32 : i32, i32
  }
  func.func @transform_1(%arg0: i32) -> (i32, i32) {
    %c0_i32 = arith.constant 0 : i32
    %c0_i32_0 = arith.constant 0 : i32
    %c0_i32_1 = arith.constant 0 : i32
    return %c0_i32, %c0_i32_0 : i32, i32
  }
  func.func @transform_2(%arg0: i32) -> (i32, i32, i32) {
    %c0_i32 = arith.constant 0 : i32
    %c0_i32_0 = arith.constant 0 : i32
    %c0_i32_1 = arith.constant 0 : i32
    return %arg0, %c0_i32, %c0_i32_0 : i32, i32, i32
  }
}

</mosaic_0001>

<llo_original>
// kernel: tpu_custom_call.1
$region0: #{tpu_custom_call.1}
  #allocation0 [shape = 'u32[]', space=smem, size = 0x4, offset = 0x4, fixed_abs, tag = 'smem constant byte address 0x4 - core index']
  #allocation1 [shape = 'u32[144,128]{1,0:T(1,128)}', space=vmem, size = 0x12000, scoped, tag = 'internal scratch']
  %s0 = inlined_call_operand.vmem [shape: f32[1024,12], index: 0, kind: input, shape index: {}]
  %s1 = inlined_call_operand.vmem [shape: f32[8,24], index: 1, kind: input, shape index: {}]
  %s2 = inlined_call_operand.hbm [shape: f32[2,1,512], index: 2, kind: output, shape index: {}]
  %s3 = sld [smem:[#allocation0]]
  $region41: #{tpu_custom_call.1} parent=0
    _
  %s5 = ssub.s32 1, %s3
  %s6 = scalar_select 0, %s5, %s3
  $region1: #{tpu_custom_call.1} parent=0
    #allocation2 [shape = 'u8[4096]{0}', space=vmem, size = 0x1000, scoped, tag = 'output window, operand 0']
    #allocation3 [shape = 's32[2]{0}', space=sflag, size = 0x8, scoped, tag = 'scoped memory for tpu_custom_call.1']
    %7 = vsyncpa [#allocation3], 0
    %s8 = scalar_lea.sflag [#allocation3], 1
    %9 = vsyncpa %s8, 0
    loop: start=0, step=1, limit=4
    $region2: #{tpu_custom_call.1} parent=1 // loop_pre_header
      _
    $region3: #{tpu_custom_call.1} parent=1 // loop_header
      %s11 = sphi 0, %s15
      %p12 = scmp.ge.s32.totalorder %s11, 4
      %s21 = sphi 0, %s23
      %s24 = sphi 0, %s21
      %s25 = sphi 0, %s24
      %s41 = sphi 0, %s25
      %s45 = sphi 0, %s45
      %s47 = sphi 0, %s45
      %s48 = sphi 0, %s47
      %s62 = sphi 0, %s48
      %s68 = sphi 0, %s70
      %s71 = sphi 0, %s68
      %s72 = sphi 0, %s71
      %s88 = sphi 0, %s72
    $region4: #{tpu_custom_call.1} parent=1 // loop_header_branch
      %14 = sbr.rel (%p12) target = $region8
    $region5: #{tpu_custom_call.1} parent=1 // loop_body
      %s16 = ssub.s32 %s11, 1
      %s17 = ssub.s32 %s11, 2
      %s18 = sadd.s32 %s11, 1
      %s19 = ssub.s32 %s11, %s18
      %p20 = scmp.eq.s32.totalorder %s19, 0
      %s22 = sadd.s32 %s21, 1
      %s23 = scalar_select %p20, %s21, %s22
      %p26 = pneg %p20
      %p27 = scmp.eq.s32.totalorder %s11, 1
      %p28 = por %p26, %p27
      %p29 = scmp.ne.s32.totalorder %s21, %s24
      %p30 = scmp.eq.s32.totalorder %s11, 0
      %p31 = por %p29, %p30
      %p32 = scmp.ne.s32.totalorder %s21, %s24
      %p33 = scmp.eq.s32.totalorder %s16, 1
      %p34 = por %p32, %p33
      %p35 = scmp.ne.s32.totalorder %s24, %s25
      %p36 = scmp.eq.s32.totalorder %s16, 0
      %p37 = por %p35, %p36
      %p38 = scmp.ne.s32.totalorder %s24, %s25
      %p39 = scmp.eq.s32.totalorder %s17, 1
      %p40 = por %p38, %p39
      %p42 = scmp.ne.s32.totalorder %s25, %s41
      %p43 = scmp.eq.s32.totalorder %s17, 0
      %p44 = por %p42, %p43
      %s46 = sadd.s32 %s45, 1
      %p49 = scmp.eq.s32.totalorder %s11, 1
      %p50 = scmp.ne.s32.totalorder %s45, %s47
      %p51 = scmp.eq.s32.totalorder %s11, 0
      %p52 = por %p50, %p51
      %p53 = scmp.ne.s32.totalorder %s45, %s47
      %p54 = scmp.eq.s32.totalorder %s16, 1
      %p55 = por %p53, %p54
      %p56 = scmp.ne.s32.totalorder %s47, %s48
      %p57 = scmp.eq.s32.totalorder %s16, 0
      %p58 = por %p56, %p57
      %p59 = scmp.ne.s32.totalorder %s47, %s48
      %p60 = scmp.eq.s32.totalorder %s17, 1
      %p61 = por %p59, %p60
      %p63 = scmp.ne.s32.totalorder %s48, %s62
      %p64 = scmp.eq.s32.totalorder %s17, 0
      %p65 = por %p63, %p64
      %s66 = ssub.s32 %s11, %s18
      %p67 = scmp.eq.s32.totalorder %s66, 0
      %s69 = sadd.s32 %s68, 1
      %s70 = scalar_select %p67, %s68, %s69
      %p73 = pneg %p67
      %p74 = scmp.eq.s32.totalorder %s11, 1
      %p75 = por %p73, %p74
      %p76 = scmp.ne.s32.totalorder %s68, %s71
      %p77 = scmp.eq.s32.totalorder %s11, 0
      %p78 = por %p76, %p77
      %p79 = scmp.ne.s32.totalorder %s68, %s71
      %p80 = scmp.eq.s32.totalorder %s16, 1
      %p81 = por %p79, %p80
      %p82 = scmp.ne.s32.totalorder %s71, %s72
      %p83 = scmp.eq.s32.totalorder %s16, 0
      %p84 = por %p82, %p83
      %p85 = scmp.ne.s32.totalorder %s71, %s72
      %p86 = scmp.eq.s32.totalorder %s17, 1
      %p87 = por %p85, %p86
      %p89 = scmp.ne.s32.totalorder %s72, %s88
      %p90 = scmp.eq.s32.totalorder %s17, 0
      %p91 = por %p89, %p90
      %p92 = scmp.le.s32.totalorder 1, %s11
      %p93 = scmp.lt.s32.totalorder %s11, 3
      %p94 = pnand %p92, %p93
      %p95 = pneg %p94
      // Predicated region
      $region9: #{tpu_custom_call.1} parent=5 // pred_check
        _
      $region10: #{tpu_custom_call.1} parent=5 // pred_check_branch
        %97 = sbr.rel (%p94) target = $region12
      $region11: #{tpu_custom_call.1} parent=5 // pred_region
        %s98 = ssub.s32 %s11, 1
        // Predicated region
        $region13: #{tpu_custom_call.1} parent=11 // pred_check
          %p99 = pneg %p58
        $region14: #{tpu_custom_call.1} parent=11 // pred_check_branch
          %101 = sbr.rel (%p99) target = $region16
        $region15: #{tpu_custom_call.1} parent=11 // pred_region
          _
        $region16: #{tpu_custom_call.1} parent=11 // pred_fallthru
          _
      $region12: #{tpu_custom_call.1} parent=5 // pred_fallthru
        _
      %p102 = scmp.lt.s32.totalorder %s11, 2
      // Predicated region
      $region17: #{tpu_custom_call.1} parent=5 // pred_check
        %p103 = pneg %p102
      $region18: #{tpu_custom_call.1} parent=5 // pred_check_branch
        %105 = sbr.rel (%p103) target = $region20
      $region19: #{tpu_custom_call.1} parent=5 // pred_region
        // Predicated region
        $region21: #{tpu_custom_call.1} parent=19 // pred_check
          %p106 = pneg %p31
        $region22: #{tpu_custom_call.1} parent=19 // pred_check_branch
          %108 = sbr.rel (%p106) target = $region24
        $region23: #{tpu_custom_call.1} parent=19 // pred_region
          %s109 = smul.u32 64, %s11
          %p110 = scmp.lt.s32.totalorder %s109, 127
          %s111 = scalar_select %p110, %s109, 127
          %s112 = smul.addr %s111, 8
          %s113 = scalar_lea.vmem %s0, %s112
          %s114 = smul.u32 64, %s11
        $region24: #{tpu_custom_call.1} parent=19 // pred_fallthru
          _
      $region20: #{tpu_custom_call.1} parent=5 // pred_fallthru
        _
      %p115 = scmp.le.s32.totalorder 1, %s11
      %p116 = scmp.lt.s32.totalorder %s11, 3
      %p117 = pnand %p115, %p116
      %p118 = pneg %p117
      // Predicated region
      $region25: #{tpu_custom_call.1} parent=5 // pred_check
        _
      $region26: #{tpu_custom_call.1} parent=5 // pred_check_branch
        %120 = sbr.rel (%p117) target = $region28
      $region27: #{tpu_custom_call.1} parent=5 // pred_region
        %s121 = ssub.s32 %s11, 1
        %s122 = smul.u32 64, %s16
        %p123 = scmp.lt.s32.totalorder %s122, 127
        %s124 = scalar_select %p123, %s122, 127
        %s125 = smul.addr %s124, 8
        %s126 = scalar_lea.vmem %s0, %s125
        %p127 = pneg %p37
        %p128 = pneg %p34
        %p129 = pneg %p58
        %p130 = pneg %p55
        %p131 = pneg %p84
        %p132 = pneg %p81
        %s133 = sand.u32 %s71, 1
        %s134 = scalar_lea.sflag [#allocation3], %s133
        %s135 = sand.u32 %s71, 1
        %s136 = smul.addr %s135, 4
        %s137 = scalar_lea.vmem [#allocation2], %s136
        %s138 = smul.u32 64, %s16
        %p139 = scmp.lt.s32.totalorder %s138, 127
        %s140 = scalar_select %p139, %s138, 127
        %s141 = smul.addr %s140, 8
        %s142 = scalar_lea.vmem %s0, %s141
        %s143 = smul.u32 64, %s16
        %v144 = vld [vmem:[%s142] sm:$0xff]
        %v145 = vld [vmem:[%s142 + $0x8] sm:$0xff]
        %v146 = vld [vmem:[%s142 + $0x10] sm:$0xff]
        %v147 = vld [vmem:[%s142 + $0x18] sm:$0xff]
        %v148 = vld [vmem:[%s142 + $0x20] sm:$0xff]
        %v149 = vld [vmem:[%s142 + $0x28] sm:$0xff]
        %v150 = vld [vmem:[%s142 + $0x30] sm:$0xff]
        %v151 = vld [vmem:[%s142 + $0x38] sm:$0xff]
        %v152 = vld [vmem:[%s142 + $0x40] sm:$0xff]
        %v153 = vld [vmem:[%s142 + $0x48] sm:$0xff]
        %v154 = vld [vmem:[%s142 + $0x50] sm:$0xff]
        %v155 = vld [vmem:[%s142 + $0x58] sm:$0xff]
        %v156 = vld [vmem:[%s142 + $0x60] sm:$0xff]
        %v157 = vld [vmem:[%s142 + $0x68] sm:$0xff]
        %v158 = vld [vmem:[%s142 + $0x70] sm:$0xff]
        %v159 = vld [vmem:[%s142 + $0x78] sm:$0xff]
        %v160 = vld [vmem:[%s142 + $0x80] sm:$0xff]
        %v161 = vld [vmem:[%s142 + $0x88] sm:$0xff]
        %v162 = vld [vmem:[%s142 + $0x90] sm:$0xff]
        %v163 = vld [vmem:[%s142 + $0x98] sm:$0xff]
        %v164 = vld [vmem:[%s142 + $0xa0] sm:$0xff]
        %v165 = vld [vmem:[%s142 + $0xa8] sm:$0xff]
        %v166 = vld [vmem:[%s142 + $0xb0] sm:$0xff]
        %v167 = vld [vmem:[%s142 + $0xb8] sm:$0xff]
        %v168 = vld [vmem:[%s142 + $0xc0] sm:$0xff]
        %v169 = vld [vmem:[%s142 + $0xc8] sm:$0xff]
        %v170 = vld [vmem:[%s142 + $0xd0] sm:$0xff]
        %v171 = vld [vmem:[%s142 + $0xd8] sm:$0xff]
        %v172 = vld [vmem:[%s142 + $0xe0] sm:$0xff]
        %v173 = vld [vmem:[%s142 + $0xe8] sm:$0xff]
        %v174 = vld [vmem:[%s142 + $0xf0] sm:$0xff]
        %v175 = vld [vmem:[%s142 + $0xf8] sm:$0xff]
        %v176 = vld [vmem:[%s142 + $0x100] sm:$0xff]
        %v177 = vld [vmem:[%s142 + $0x108] sm:$0xff]
        %v178 = vld [vmem:[%s142 + $0x110] sm:$0xff]
        %v179 = vld [vmem:[%s142 + $0x118] sm:$0xff]
        %v180 = vld [vmem:[%s142 + $0x120] sm:$0xff]
        %v181 = vld [vmem:[%s142 + $0x128] sm:$0xff]
        %v182 = vld [vmem:[%s142 + $0x130] sm:$0xff]
        %v183 = vld [vmem:[%s142 + $0x138] sm:$0xff]
        %v184 = vld [vmem:[%s142 + $0x140] sm:$0xff]
        %v185 = vld [vmem:[%s142 + $0x148] sm:$0xff]
        %v186 = vld [vmem:[%s142 + $0x150] sm:$0xff]
        %v187 = vld [vmem:[%s142 + $0x158] sm:$0xff]
        %v188 = vld [vmem:[%s142 + $0x160] sm:$0xff]
        %v189 = vld [vmem:[%s142 + $0x168] sm:$0xff]
        %v190 = vld [vmem:[%s142 + $0x170] sm:$0xff]
        %v191 = vld [vmem:[%s142 + $0x178] sm:$0xff]
        %v192 = vld [vmem:[%s142 + $0x180] sm:$0xff]
        %v193 = vld [vmem:[%s142 + $0x188] sm:$0xff]
        %v194 = vld [vmem:[%s142 + $0x190] sm:$0xff]
        %v195 = vld [vmem:[%s142 + $0x198] sm:$0xff]
        %v196 = vld [vmem:[%s142 + $0x1a0] sm:$0xff]
        %v197 = vld [vmem:[%s142 + $0x1a8] sm:$0xff]
        %v198 = vld [vmem:[%s142 + $0x1b0] sm:$0xff]
        %v199 = vld [vmem:[%s142 + $0x1b8] sm:$0xff]
        %v200 = vld [vmem:[%s142 + $0x1c0] sm:$0xff]
        %v201 = vld [vmem:[%s142 + $0x1c8] sm:$0xff]
        %v202 = vld [vmem:[%s142 + $0x1d0] sm:$0xff]
        %v203 = vld [vmem:[%s142 + $0x1d8] sm:$0xff]
        %v204 = vld [vmem:[%s142 + $0x1e0] sm:$0xff]
        %v205 = vld [vmem:[%s142 + $0x1e8] sm:$0xff]
        %v206 = vld [vmem:[%s142 + $0x1f0] sm:$0xff]
        %v207 = vld [vmem:[%s142 + $0x1f8] sm:$0xff]
        %v208 = vld [vmem:[%s1] sm:$0xff]
        %v209 = vld [vmem:[%s1] sm:$0x1]
        %211 = vset.pattern.permute.xlu0 21
        %212 = vperm.xlu0 %211, %v208
        %v213 = vpop.permute.xlu0 %212
        %vm215 = vcmask 97280
        %v216 = vsel %vm215, %v208, 0
        %v219 = vsel %vm215, %v144, 0
        %v222 = vsel %vm215, %v145, 0
        %v225 = vsel %vm215, %v146, 0
        %v228 = vsel %vm215, %v147, 0
        %v231 = vsel %vm215, %v148, 0
        %v234 = vsel %vm215, %v149, 0
        %v237 = vsel %vm215, %v150, 0
        %v240 = vsel %vm215, %v151, 0
        %v243 = vsel %vm215, %v152, 0
        %v246 = vsel %vm215, %v153, 0
        %v249 = vsel %vm215, %v154, 0
        %v252 = vsel %vm215, %v155, 0
        %v255 = vsel %vm215, %v156, 0
        %v258 = vsel %vm215, %v157, 0
        %v261 = vsel %vm215, %v158, 0
        %v264 = vsel %vm215, %v159, 0
        %v267 = vsel %vm215, %v160, 0
        %v270 = vsel %vm215, %v161, 0
        %v273 = vsel %vm215, %v162, 0
        %v276 = vsel %vm215, %v163, 0
        %v279 = vsel %vm215, %v164, 0
        %v282 = vsel %vm215, %v165, 0
        %v285 = vsel %vm215, %v166, 0
        %v288 = vsel %vm215, %v167, 0
        %v291 = vsel %vm215, %v168, 0
        %v294 = vsel %vm215, %v169, 0
        %v297 = vsel %vm215, %v170, 0
        %v300 = vsel %vm215, %v171, 0
        %v303 = vsel %vm215, %v172, 0
        %v306 = vsel %vm215, %v173, 0
        %v309 = vsel %vm215, %v174, 0
        %v312 = vsel %vm215, %v175, 0
        %v315 = vsel %vm215, %v176, 0
        %v318 = vsel %vm215, %v177, 0
        %v321 = vsel %vm215, %v178, 0
        %v324 = vsel %vm215, %v179, 0
        %v327 = vsel %vm215, %v180, 0
        %v330 = vsel %vm215, %v181, 0
        %v333 = vsel %vm215, %v182, 0
        %v336 = vsel %vm215, %v183, 0
        %v339 = vsel %vm215, %v184, 0
        %v342 = vsel %vm215, %v185, 0
        %v345 = vsel %vm215, %v186, 0
        %v348 = vsel %vm215, %v187, 0
        %v351 = vsel %vm215, %v188, 0
        %v354 = vsel %vm215, %v189, 0
        %v357 = vsel %vm215, %v190, 0
        %v360 = vsel %vm215, %v191, 0
        %v363 = vsel %vm215, %v192, 0
        %v366 = vsel %vm215, %v193, 0
        %v369 = vsel %vm215, %v194, 0
        %v372 = vsel %vm215, %v195, 0
        %v375 = vsel %vm215, %v196, 0
        %v378 = vsel %vm215, %v197, 0
        %v381 = vsel %vm215, %v198, 0
        %v384 = vsel %vm215, %v199, 0
        %v387 = vsel %vm215, %v200, 0
        %v390 = vsel %vm215, %v201, 0
        %v393 = vsel %vm215, %v202, 0
        %v396 = vsel %vm215, %v203, 0
        %v399 = vsel %vm215, %v204, 0
        %v402 = vsel %vm215, %v205, 0
        %v405 = vsel %vm215, %v206, 0
        %v408 = vsel %vm215, %v207, 0
        %410 = vmatprep.subr.mxu0 0.0
        %411 = vmatpush1.xpose.msra.mxu0 %v264
        %412 = vmatprep.subr.mxu0 0.0
        %413 = vmatpush1.xpose.msra.mxu0 %v261
        %414 = vmatprep.subr.mxu0 0.0
        %415 = vmatpush1.xpose.msra.mxu0 %v258
        %416 = vmatprep.subr.mxu0 0.0
        %417 = vmatpush1.xpose.msra.mxu0 %v255
        %418 = vmatprep.subr.mxu0 0.0
        %419 = vmatpush1.xpose.msra.mxu0 %v252
        %420 = vmatprep.subr.mxu0 0.0
        %421 = vmatpush1.xpose.msra.mxu0 %v249
        %422 = vmatprep.subr.mxu0 0.0
        %423 = vmatpush1.xpose.msra.mxu0 %v246
        %424 = vmatprep.subr.mxu0 0.0
        %425 = vmatpush1.xpose.msra.mxu0 %v243
        %426 = vmatprep.subr.mxu0 0.0
        %427 = vmatpush1.xpose.msra.mxu0 %v240
        %428 = vmatprep.subr.mxu0 0.0
        %429 = vmatpush1.xpose.msra.mxu0 %v237
        %430 = vmatprep.subr.mxu0 0.0
        %431 = vmatpush1.xpose.msra.mxu0 %v234
        %432 = vmatprep.subr.mxu0 0.0
        %433 = vmatpush1.xpose.msra.mxu0 %v231
        %434 = vmatprep.subr.mxu0 0.0
        %435 = vmatpush1.xpose.msra.mxu0 %v228
        %436 = vmatprep.subr.mxu0 0.0
        %437 = vmatpush1.xpose.msra.mxu0 %v225
        %438 = vmatprep.subr.mxu0 0.0
        %439 = vmatpush1.xpose.msra.mxu0 %v222
        %440 = vmatprep.subr.mxu0 0.0
        %441 = vmatpush1.xpose.msra.mxu0 %v219
        %442 = vmatprep.subr.mxu0 0.0
        %443 = vmatpush2.xpose.msra.mxu0 %v312
        %444 = vmatprep.subr.mxu0 0.0
        %445 = vmatpush2.xpose.msra.mxu0 %v309
        %446 = vmatprep.subr.mxu0 0.0
        %447 = vmatpush2.xpose.msra.mxu0 %v306
        %448 = vmatprep.subr.mxu0 0.0
        %449 = vmatpush2.xpose.msra.mxu0 %v303
        %450 = vmatprep.subr.mxu0 0.0
        %451 = vmatpush2.xpose.msra.mxu0 %v300
        %452 = vmatprep.subr.mxu0 0.0
        %453 = vmatpush2.xpose.msra.mxu0 %v297
        %454 = vmatprep.subr.mxu0 0.0
        %455 = vmatpush2.xpose.msra.mxu0 %v294
        %456 = vmatprep.subr.mxu0 0.0
        %457 = vmatpush2.xpose.msra.mxu0 %v291
        %458 = vmatprep.subr.mxu0 0.0
        %459 = vmatpush2.xpose.msra.mxu0 %v288
        %460 = vmatprep.subr.mxu0 0.0
        %461 = vmatpush2.xpose.msra.mxu0 %v285
        %462 = vmatprep.subr.mxu0 0.0
        %463 = vmatpush2.xpose.msra.mxu0 %v282
        %464 = vmatprep.subr.mxu0 0.0
        %465 = vmatpush2.xpose.msra.mxu0 %v279
        %466 = vmatprep.subr.mxu0 0.0
        %467 = vmatpush2.xpose.msra.mxu0 %v276
        %468 = vmatprep.subr.mxu0 0.0
        %469 = vmatpush2.xpose.msra.mxu0 %v273
        %470 = vmatprep.subr.mxu0 0.0
        %471 = vmatpush2.xpose.msra.mxu0 %v270
        %472 = vmatprep.subr.mxu0 0.0
        %473 = vmatpush2.xpose.msra.mxu0 %v267
        %474 = vmatprep.mubr.f32.mxu0 0.0
        %475 = vmatmul.mubr.f32.gmra.mxu0 %v216
        %v476 = vpop.f32.mrf.mxu0
        %v477 = vadd.f32 %v213, %v476
        %v478 = vpop.f32.mrf.mxu0
        %v479 = vadd.f32 %v213, %v478
        %480 = vdwg.mxu0
        %481 = vmatprep.subr.mxu0 0.0
        %482 = vmatpush1.xpose.msra.mxu0 %v360
        %483 = vmatprep.subr.mxu0 0.0
        %484 = vmatpush1.xpose.msra.mxu0 %v357
        %485 = vmatprep.subr.mxu0 0.0
        %486 = vmatpush1.xpose.msra.mxu0 %v354
        %487 = vmatprep.subr.mxu0 0.0
        %488 = vmatpush1.xpose.msra.mxu0 %v351
        %489 = vmatprep.subr.mxu0 0.0
        %490 = vmatpush1.xpose.msra.mxu0 %v348
        %491 = vmatprep.subr.mxu0 0.0
        %492 = vmatpush1.xpose.msra.mxu0 %v345
        %493 = vmatprep.subr.mxu0 0.0
        %494 = vmatpush1.xpose.msra.mxu0 %v342
        %495 = vmatprep.subr.mxu0 0.0
        %496 = vmatpush1.xpose.msra.mxu0 %v339
        %497 = vmatprep.subr.mxu0 0.0
        %498 = vmatpush1.xpose.msra.mxu0 %v336
        %499 = vmatprep.subr.mxu0 0.0
        %500 = vmatpush1.xpose.msra.mxu0 %v333
        %501 = vmatprep.subr.mxu0 0.0
        %502 = vmatpush1.xpose.msra.mxu0 %v330
        %503 = vmatprep.subr.mxu0 0.0
        %504 = vmatpush1.xpose.msra.mxu0 %v327
        %505 = vmatprep.subr.mxu0 0.0
        %506 = vmatpush1.xpose.msra.mxu0 %v324
        %507 = vmatprep.subr.mxu0 0.0
        %508 = vmatpush1.xpose.msra.mxu0 %v321
        %509 = vmatprep.subr.mxu0 0.0
        %510 = vmatpush1.xpose.msra.mxu0 %v318
        %511 = vmatprep.subr.mxu0 0.0
        %512 = vmatpush1.xpose.msra.mxu0 %v315
        %513 = vmatprep.subr.mxu0 0.0
        %514 = vmatpush2.xpose.msra.mxu0 %v408
        %515 = vmatprep.subr.mxu0 0.0
        %516 = vmatpush2.xpose.msra.mxu0 %v405
        %517 = vmatprep.subr.mxu0 0.0
        %518 = vmatpush2.xpose.msra.mxu0 %v402
        %519 = vmatprep.subr.mxu0 0.0
        %520 = vmatpush2.xpose.msra.mxu0 %v399
        %521 = vmatprep.subr.mxu0 0.0
        %522 = vmatpush2.xpose.msra.mxu0 %v396
        %523 = vmatprep.subr.mxu0 0.0
        %524 = vmatpush2.xpose.msra.mxu0 %v393
        %525 = vmatprep.subr.mxu0 0.0
        %526 = vmatpush2.xpose.msra.mxu0 %v390
        %527 = vmatprep.subr.mxu0 0.0
        %528 = vmatpush2.xpose.msra.mxu0 %v387
        %529 = vmatprep.subr.mxu0 0.0
        %530 = vmatpush2.xpose.msra.mxu0 %v384
        %531 = vmatprep.subr.mxu0 0.0
        %532 = vmatpush2.xpose.msra.mxu0 %v381
        %533 = vmatprep.subr.mxu0 0.0
        %534 = vmatpush2.xpose.msra.mxu0 %v378
        %535 = vmatprep.subr.mxu0 0.0
        %536 = vmatpush2.xpose.msra.mxu0 %v375
        %537 = vmatprep.subr.mxu0 0.0
        %538 = vmatpush2.xpose.msra.mxu0 %v372
        %539 = vmatprep.subr.mxu0 0.0
        %540 = vmatpush2.xpose.msra.mxu0 %v369
        %541 = vmatprep.subr.mxu0 0.0
        %542 = vmatpush2.xpose.msra.mxu0 %v366
        %543 = vmatprep.subr.mxu0 0.0
        %544 = vmatpush2.xpose.msra.mxu0 %v363
        %545 = vmatprep.mubr.f32.mxu0 0.0
        %546 = vmatmul.mubr.f32.gmra.mxu0 %v216
        %v547 = vpop.f32.mrf.mxu0
        %v548 = vadd.f32 %v213, %v547
        %v549 = vpop.f32.mrf.mxu0
        %v550 = vadd.f32 %v213, %v549
        %551 = vdwg.mxu0
        %v552 = vmax.f32 %v477, 0.0
        %v553 = vmax.f32 %v479, 0.0
        %v554 = vmax.f32 %v548, 0.0
        %v555 = vmax.f32 %v550, 0.0
        %556 = vset.pattern.permute.xlu0 22
        %557 = vperm.xlu0 %556, %v208
        %v558 = vpop.permute.xlu0 %557
        %560 = vrot.lane.b32.xlu0 %v208, 116
        %v561 = vpop.permute.xlu0 %560
        %vm562 = vcmask 64512
        %v563 = vsel %vm562, %v561, 0
        %565 = vmatprep.subr.mxu0 0.0
        %566 = vmatpush1.msra.mxu0 0.0
        %567 = vmatprep.subr.mxu0 0.0
        %568 = vmatpush1.msra.mxu0 0.0
        %569 = vmatprep.subr.mxu0 0.0
        %570 = vmatpush1.msra.mxu0 0.0
        %571 = vmatprep.subr.mxu0 0.0
        %572 = vmatpush1.msra.mxu0 0.0
        %573 = vmatprep.subr.mxu0 0.0
        %574 = vmatpush1.msra.mxu0 0.0
        %575 = vmatprep.subr.mxu0 0.0
        %576 = vmatpush1.msra.mxu0 0.0
        %577 = vmatprep.subr.mxu0 0.0
        %578 = vmatpush1.msra.mxu0 0.0
        %579 = vmatprep.subr.mxu0 0.0
        %580 = vmatpush1.msra.mxu0 0.0
        %581 = vmatprep.subr.mxu0 0.0
        %582 = vmatpush1.msra.mxu0 0.0
        %583 = vmatprep.subr.mxu0 0.0
        %584 = vmatpush1.msra.mxu0 0.0
        %585 = vmatprep.subr.mxu0 0.0
        %586 = vmatpush1.msra.mxu0 0.0
        %587 = vmatprep.subr.mxu0 0.0
        %588 = vmatpush1.msra.mxu0 0.0
        %589 = vmatprep.subr.mxu0 0.0
        %590 = vmatpush1.msra.mxu0 0.0
        %591 = vmatprep.subr.mxu0 0.0
        %592 = vmatpush1.msra.mxu0 0.0
        %593 = vmatprep.subr.mxu0 0.0
        %594 = vmatpush1.msra.mxu0 0.0
        %595 = vmatprep.subr.mxu0 %v553
        %596 = vmatpush1.msra.mxu0 %v552
        %597 = vmatprep.subr.mxu0 0.0
        %598 = vmatpush2.msra.mxu0 0.0
        %599 = vmatprep.subr.mxu0 0.0
        %600 = vmatpush2.msra.mxu0 0.0
        %601 = vmatprep.subr.mxu0 0.0
        %602 = vmatpush2.msra.mxu0 0.0
        %603 = vmatprep.subr.mxu0 0.0
        %604 = vmatpush2.msra.mxu0 0.0
        %605 = vmatprep.subr.mxu0 0.0
        %606 = vmatpush2.msra.mxu0 0.0
        %607 = vmatprep.subr.mxu0 0.0
        %608 = vmatpush2.msra.mxu0 0.0
        %609 = vmatprep.subr.mxu0 0.0
        %610 = vmatpush2.msra.mxu0 0.0
        %611 = vmatprep.subr.mxu0 0.0
        %612 = vmatpush2.msra.mxu0 0.0
        %613 = vmatprep.subr.mxu0 0.0
        %614 = vmatpush2.msra.mxu0 0.0
        %615 = vmatprep.subr.mxu0 0.0
        %616 = vmatpush2.msra.mxu0 0.0
        %617 = vmatprep.subr.mxu0 0.0
        %618 = vmatpush2.msra.mxu0 0.0
        %619 = vmatprep.subr.mxu0 0.0
        %620 = vmatpush2.msra.mxu0 0.0
        %621 = vmatprep.subr.mxu0 0.0
        %622 = vmatpush2.msra.mxu0 0.0
        %623 = vmatprep.subr.mxu0 0.0
        %624 = vmatpush2.msra.mxu0 0.0
        %625 = vmatprep.subr.mxu0 0.0
        %626 = vmatpush2.msra.mxu0 0.0
        %627 = vmatprep.subr.mxu0 0.0
        %628 = vmatpush2.msra.mxu0 0.0
        %629 = vmatprep.mubr.f32.mxu0 0.0
        %630 = vmatmul.mubr.f32.gmra.mxu0 %v563
        %v631 = vpop.f32.mrf.mxu0
        %v632 = vadd.f32 %v558, %v631
        %v633 = vpop.f32.mrf.mxu0
        %v634 = vadd.f32 %v558, %v633
        %635 = vdwg.mxu0
        %636 = vmatprep.subr.mxu0 0.0
        %637 = vmatpush1.msra.mxu0 0.0
        %638 = vmatprep.subr.mxu0 0.0
        %639 = vmatpush1.msra.mxu0 0.0
        %640 = vmatprep.subr.mxu0 0.0
        %641 = vmatpush1.msra.mxu0 0.0
        %642 = vmatprep.subr.mxu0 0.0
        %643 = vmatpush1.msra.mxu0 0.0
        %644 = vmatprep.subr.mxu0 0.0
        %645 = vmatpush1.msra.mxu0 0.0
        %646 = vmatprep.subr.mxu0 0.0
        %647 = vmatpush1.msra.mxu0 0.0
        %648 = vmatprep.subr.mxu0 0.0
        %649 = vmatpush1.msra.mxu0 0.0
        %650 = vmatprep.subr.mxu0 0.0
        %651 = vmatpush1.msra.mxu0 0.0
        %652 = vmatprep.subr.mxu0 0.0
        %653 = vmatpush1.msra.mxu0 0.0
        %654 = vmatprep.subr.mxu0 0.0
        %655 = vmatpush1.msra.mxu0 0.0
        %656 = vmatprep.subr.mxu0 0.0
        %657 = vmatpush1.msra.mxu0 0.0
        %658 = vmatprep.subr.mxu0 0.0
        %659 = vmatpush1.msra.mxu0 0.0
        %660 = vmatprep.subr.mxu0 0.0
        %661 = vmatpush1.msra.mxu0 0.0
        %662 = vmatprep.subr.mxu0 0.0
        %663 = vmatpush1.msra.mxu0 0.0
        %664 = vmatprep.subr.mxu0 0.0
        %665 = vmatpush1.msra.mxu0 0.0
        %666 = vmatprep.subr.mxu0 %v555
        %667 = vmatpush1.msra.mxu0 %v554
        %668 = vmatprep.subr.mxu0 0.0
        %669 = vmatpush2.msra.mxu0 0.0
        %670 = vmatprep.subr.mxu0 0.0
        %671 = vmatpush2.msra.mxu0 0.0
        %672 = vmatprep.subr.mxu0 0.0
        %673 = vmatpush2.msra.mxu0 0.0
        %674 = vmatprep.subr.mxu0 0.0
        %675 = vmatpush2.msra.mxu0 0.0
        %676 = vmatprep.subr.mxu0 0.0
        %677 = vmatpush2.msra.mxu0 0.0
        %678 = vmatprep.subr.mxu0 0.0
        %679 = vmatpush2.msra.mxu0 0.0
        %680 = vmatprep.subr.mxu0 0.0
        %681 = vmatpush2.msra.mxu0 0.0
        %682 = vmatprep.subr.mxu0 0.0
        %683 = vmatpush2.msra.mxu0 0.0
        %684 = vmatprep.subr.mxu0 0.0
        %685 = vmatpush2.msra.mxu0 0.0
        %686 = vmatprep.subr.mxu0 0.0
        %687 = vmatpush2.msra.mxu0 0.0
        %688 = vmatprep.subr.mxu0 0.0
        %689 = vmatpush2.msra.mxu0 0.0
        %690 = vmatprep.subr.mxu0 0.0
        %691 = vmatpush2.msra.mxu0 0.0
        %692 = vmatprep.subr.mxu0 0.0
        %693 = vmatpush2.msra.mxu0 0.0
        %694 = vmatprep.subr.mxu0 0.0
        %695 = vmatpush2.msra.mxu0 0.0
        %696 = vmatprep.subr.mxu0 0.0
        %697 = vmatpush2.msra.mxu0 0.0
        %698 = vmatprep.subr.mxu0 0.0
        %699 = vmatpush2.msra.mxu0 0.0
        %700 = vmatprep.mubr.f32.mxu0 0.0
        %701 = vmatmul.mubr.f32.gmra.mxu0 %v563
        %v702 = vpop.f32.mrf.mxu0
        %v703 = vadd.f32 %v558, %v702
        %v704 = vpop.f32.mrf.mxu0
        %v705 = vadd.f32 %v558, %v704
        %706 = vdwg.mxu0
        %v707 = vmax.f32 %v632, 0.0
        %v708 = vmax.f32 %v634, 0.0
        %v709 = vmax.f32 %v703, 0.0
        %v710 = vmax.f32 %v705, 0.0
        %711 = vset.pattern.permute.xlu0 20
        %712 = vperm.xlu0 %711, %v208
        %v713 = vpop.permute.xlu0 %712
        %v715 = vmul.f32 %v713, %v707
        %v716 = vmul.f32 %v713, %v708
        %v717 = vmul.f32 %v713, %v709
        %v718 = vmul.f32 %v713, %v710
        %v719 = vrot.slane %v715, 4
        %v720 = vadd.f32 %v715, %v719
        %v721 = vrot.slane %v720, 2
        %v722 = vadd.f32 %v720, %v721
        %v723 = vrot.slane %v722, 1
        %v724 = vadd.f32 %v722, %v723
        %v725 = vrot.slane %v716, 4
        %v726 = vadd.f32 %v716, %v725
        %v727 = vrot.slane %v726, 2
        %v728 = vadd.f32 %v726, %v727
        %v729 = vrot.slane %v728, 1
        %v730 = vadd.f32 %v728, %v729
        %v731 = vrot.slane %v717, 4
        %v732 = vadd.f32 %v717, %v731
        %v733 = vrot.slane %v732, 2
        %v734 = vadd.f32 %v732, %v733
        %v735 = vrot.slane %v734, 1
        %v736 = vadd.f32 %v734, %v735
        %v737 = vrot.slane %v718, 4
        %v738 = vadd.f32 %v718, %v737
        %v739 = vrot.slane %v738, 2
        %v740 = vadd.f32 %v738, %v739
        %v741 = vrot.slane %v740, 1
        %v742 = vadd.f32 %v740, %v741
        %744 = vset.pattern.permute.xlu0 23
        %745 = vperm.xlu0 %744, %v209
        %v746 = vpop.permute.xlu0 %745
        %v748 = vadd.f32 %v724, %v746
        %v749 = vadd.f32 %v730, %v746
        %v750 = vadd.f32 %v736, %v746
        %v751 = vadd.f32 %v742, %v746
        %v756 = vcombine.low %v748, %v749
        %v757 = vcombine.low %v750, %v751
        %v759 = vunpack.c.l.s4 1966171168
        %v760 = vunpack.c.0.s8 %v759
        %v761 = vlaneseq
        %v762 = vshrl.u32 %v761, 7
        %v763 = vsub.s32 %v760, %v762
        %v764 = vrot.slane %v756, %v763
        %v766 = vunpack.c.l.s4 1966171168
        %v767 = vunpack.c.0.s8 %v766
        %v768 = vlaneseq
        %v769 = vshrl.u32 %v768, 7
        %v770 = vsub.s32 %v767, %v769
        %v771 = vrot.slane %v757, %v770
        %v772 = vcombine.low %v764, %v771
        %v774 = vunpack.c.l.s4 1966171168
        %v775 = vunpack.c.0.s8 %v774
        %v776 = vlaneseq
        %v777 = vshrl.u32 %v776, 7
        %v778 = vsub.s32 %v775, %v777
        %v779 = vrot.slane %v772, %v778
        %v781 = vlaneseq
        %vm782 = vcmp.ge.s32.totalorder %v781, 0
        %vm783 = vcmp.lt.s32.totalorder %v781, 512
        %vm784 = vmand %vm782, %vm783
        %785 = vst.msk [vmem:[%s137] sm:$0xf] %vm784, %v779
        %s786 = sand.u32 %s71, 1
        %s787 = scalar_lea.sflag [#allocation3], %s786
        %s788 = sand.u32 %s71, 1
        %s789 = smul.addr %s788, 4
        %s790 = scalar_lea.vmem [#allocation2], %s789
        // Predicated region
        $region29: #{tpu_custom_call.1} parent=27 // pred_check
          %p791 = pneg %p81
        $region30: #{tpu_custom_call.1} parent=27 // pred_check_branch
          %793 = sbr.rel (%p791) target = $region32
        $region31: #{tpu_custom_call.1} parent=27 // pred_region
          %s795 = ssub.s32 64, 64
          %796 = vsyncadd %s787, %s795
          %s797 = smul.addr %s16, 4
          %s798 = smul.addr %s797, 16
          %s799 = scalar_lea.hbm %s2, %s798
          %s801 = sshll.u32 %s790, 4
          %s802 = int_to_ptr.vmem [resolvable:$true] %s801
          %804 = dma.vmem_to_hbm [thread:$0]  %s802, 64, %s799, %s787
        $region32: #{tpu_custom_call.1} parent=27 // pred_fallthru
          _
      $region28: #{tpu_custom_call.1} parent=5 // pred_fallthru
        _
      %p805 = scmp.le.s32.totalorder 2, %s11
      // Predicated region
      $region33: #{tpu_custom_call.1} parent=5 // pred_check
        %p806 = pneg %p805
      $region34: #{tpu_custom_call.1} parent=5 // pred_check_branch
        %808 = sbr.rel (%p806) target = $region36
      $region35: #{tpu_custom_call.1} parent=5 // pred_region
        %s809 = ssub.s32 %s11, 2
        // Predicated region
        $region37: #{tpu_custom_call.1} parent=35 // pred_check
          %p810 = pneg %p87
        $region38: #{tpu_custom_call.1} parent=35 // pred_check_branch
          %812 = sbr.rel (%p810) target = $region40
        $region39: #{tpu_custom_call.1} parent=35 // pred_region
          %s813 = sand.u32 %s72, 1
          %s814 = scalar_lea.sflag [#allocation3], %s813
          %s815 = sand.u32 %s72, 1
          %s816 = smul.addr %s815, 4
          %s817 = scalar_lea.vmem [#allocation2], %s816
          %818 = dma.done %s814, 64
        $region40: #{tpu_custom_call.1} parent=35 // pred_fallthru
          _
      $region36: #{tpu_custom_call.1} parent=5 // pred_fallthru
        _
    $region6: #{tpu_custom_call.1} parent=1 // loop_footer
      %s15 = sadd.s32 1, %s11
    $region7: #{tpu_custom_call.1} parent=1 // loop_footer_branch
      %10 = sbr.rel target = $region3
    $region8: #{tpu_custom_call.1} parent=1 // loop_exit
      _
    %819 = vsyncpa [#allocation3], 1
    %s820 = scalar_lea.sflag [#allocation3], 1
    %821 = vsyncpa %s820, 1

</llo_original>
